<compile_context>
chip_gen: v5e
topology: v5e:2x2
jax: 0.10.0
libtpu: 0.0.40
codegen_flags: <defaults>
</compile_context>

<pallas_src>
import functools

import numpy as np
import jax
import jax.numpy as jnp
from jax.experimental import pallas as pl
from jax.experimental.pallas import tpu as pltpu


def _vmem():
    return pl.BlockSpec(memory_space=pltpu.MemorySpace.VMEM)


# ---------------------------------------------------------------------------
# Kernel 1: fused DGCNN graph-conv stack
#   for each layer l:  X <- tanh( ((A @ X + X) @ W_l + b_l) * inv_deg )
#   output: concat of all layer activations, (N, total_latent_dim)
# ---------------------------------------------------------------------------
def gconv_stack_kernel(a_ref, x_ref, deg_ref, *refs, num_layers):
    o_ref = refs[-1]
    wb = refs[:-1]
    # reciprocal of node_degs computed once (EUP slot), reused by every layer
    inv_deg = pl.reciprocal(deg_ref[...], approx=True)          # (N, 1) f32
    adj = a_ref[...]                                            # (N, N) bf16, 0/1
    x = x_ref[...]                                              # (N, F) f32
    outs = []
    for lv in range(num_layers):
        w = wb[2 * lv][...]
        b = wb[2 * lv + 1][...]
        pooled = jnp.dot(adj, x.astype(jnp.bfloat16),
                         preferred_element_type=jnp.float32) + x
        lin = jnp.dot(pooled, w, preferred_element_type=jnp.float32) + b
        x = jnp.tanh(lin * inv_deg)        # elementwise math kept in f32 (v5e-safe)
        outs.append(x)
    # single lane-dense store of the concatenated message layers
    o_ref[...] = jnp.concatenate(outs, axis=1)


def gconv_stack(adj_bf16, node_feat, degs, conv_params):
    n = node_feat.shape[0]
    total = sum(w.shape[1] for (w, _) in conv_params)
    flat = []
    for (w, b) in conv_params:
        flat.append(w)
        flat.append(b)
    kern = functools.partial(gconv_stack_kernel, num_layers=len(conv_params))
    # TODO(synk): for graph batches whose dense adjacency exceeds VMEM this must
    # fall back to per-layer calls with a (row_tile, k_tile) grid + accumulator
    # scratch and dimension_semantics=("parallel", "arbitrary"); at these sizes
    # full-VMEM residency + layer fusion (one adj DMA, one launch) is fastest.
    return pl.pallas_call(
        kern,
        out_shape=jax.ShapeDtypeStruct((n, total), jnp.float32),
        in_specs=[_vmem()] * (3 + len(flat)),
        out_specs=_vmem(),
    )(adj_bf16, node_feat, degs, *flat)


# ---------------------------------------------------------------------------
# Kernel 2: fused "head"
#   conv1d(1->C1, kw=C, stride=C) + ReLU
#   + MaxPool1d(2,2) (floor-truncated for odd K)
#   + conv1d(C1->C2, kw=KW, stride=1) via im2col (single matmul) + ReLU
#   + flatten (PyTorch (C2,P) order folded into mlp_w1's rows) + final ReLU
#   + Linear -> ReLU -> Linear -> log_softmax
# ---------------------------------------------------------------------------
def head_kernel(sp_ref, w1_ref, b1_ref, w2_ref, b2_ref,
                mw1_ref, mb1_ref, mw2_ref, mb2_ref, o_ref, *, kw):
    B, K, C = sp_ref.shape
    C1 = w1_ref.shape[1]
    C2 = w2_ref.shape[1]
    sp = sp_ref[...]
    # conv1: kernel==stride==C  ->  per-position matmul over the feature dim
    h1 = jnp.dot(sp.reshape(B * K, C), w1_ref[...],
                 preferred_element_type=jnp.float32) + b1_ref[...]
    h1 = jnp.maximum(h1, 0.0).reshape(B, K, C1)
    # MaxPool1d(2, 2) with floor truncation (matches PyTorch for odd K)
    M = K // 2
    pairs = h1[:, : 2 * M, :].reshape(B, M, 2, C1)
    h1p = jnp.maximum(pairs[:, :, 0, :], pairs[:, :, 1, :])
    # conv2 via im2col: one MXU push with reduction K = kw*C1
    P = M - kw + 1
    xcol = jnp.concatenate([h1p[:, i:i + P, :] for i in range(kw)], axis=-1)
    h2 = jnp.dot(xcol.reshape(B * P, kw * C1), w2_ref[...],
                 preferred_element_type=jnp.float32) + b2_ref[...]
    h2 = jnp.maximum(h2, 0.0)
    # channels-last flatten; the (C2, P) PyTorch flatten permutation is folded
    # into mlp_w1's rows in the wrapper, so no transpose is needed here.
    dense = jnp.maximum(h2.reshape(B, P * C2), 0.0)   # final conv1d_activation
    # MLP classifier + log_softmax
    h = jnp.dot(dense, mw1_ref[...], preferred_element_type=jnp.float32) + mb1_ref[...]
    h = jnp.maximum(h, 0.0)
    logits = jnp.dot(h, mw2_ref[...], preferred_element_type=jnp.float32) + mb2_ref[...]
    z = logits - jnp.max(logits, axis=1, keepdims=True)
    lse = jnp.log(jnp.sum(jnp.exp(z), axis=1, keepdims=True))
    o_ref[...] = z - lse


def head_stage(sp, w1c, b1c, w2c_flat, b2c, mw1p, mb1, mw2, mb2, kw):
    B = sp.shape[0]
    nc = mw2.shape[1]
    return pl.pallas_call(
        functools.partial(head_kernel, kw=kw),
        out_shape=jax.ShapeDtypeStruct((B, nc), jnp.float32),
        in_specs=[_vmem()] * 9,
        out_specs=_vmem(),
    )(sp, w1c, b1c, w2c_flat, b2c, mw1p, mb1, mw2, mb2)


# ---------------------------------------------------------------------------
# Batched SortPooling (JAX glue between the two kernels).
#   Per graph: top-min(k, size) rows by the last channel (descending), zero-pad
#   to k. Implemented as ONE masked batched top_k + gather (no Python per-graph
#   loop of slices / top_k / concat).
# ---------------------------------------------------------------------------
def sortpool_batched(cur, graph_sizes, k):
    n, _ = cur.shape
    sizes = jnp.asarray(graph_sizes, dtype=jnp.int32)                       # (B,)
    offsets = jnp.asarray(np.concatenate([[0], np.cumsum(graph_sizes)[:-1]]),
                          dtype=jnp.int32)                                  # (B,)
    max_g = int(max(graph_sizes))
    col = jnp.arange(max_g, dtype=jnp.int32)
    valid = col[None, :] < sizes[:, None]                                   # (B, max_g)
    gather_idx = jnp.minimum(offsets[:, None] + col[None, :], n - 1)
    sort_channel = cur[:, -1]
    vals = jnp.where(valid, sort_channel[gather_idx], -jnp.inf)             # mask cross-graph
    kk = min(k, max_g)
    _, top_local = jax.lax.top_k(vals, kk)                                  # descending
    row_idx = offsets[:, None] + top_local                                  # (B, kk) global rows
    rows = cur[row_idx]                                                     # (B, kk, total)
    keep = jnp.arange(kk)[None, :] < jnp.minimum(sizes, k)[:, None]
    rows = jnp.where(keep[:, :, None], rows, 0.0)                           # zero-pad short graphs
    if kk < k:
        rows = jnp.pad(rows, ((0, 0), (0, k - kk), (0, 0)))
    return rows                                                             # (B, k, total)


# ---------------------------------------------------------------------------
# Forward pass glue
# ---------------------------------------------------------------------------
def dgcnn_classify(params, adj, node_feat, degs, graph_sizes, k, kw):
    # adj is exactly 0/1 -> bf16 cast is lossless; halves adj HBM traffic.
    cur = gconv_stack(adj.astype(jnp.bfloat16), node_feat, degs, params["conv"])
    sp = sortpool_batched(cur, graph_sizes, k)                 # (B, k, total_latent)
    logits = head_stage(sp, params["w1c"], params["b1c"],
                        params["w2c_flat"], params["b2c"],
                        params["mlp_w1p"], params["mlp_b1"],
                        params["mlp_w2"], params["mlp_b2"], kw)
    return logits                                              # log-probs (B, num_class)


def classifier_forward(params, adj, node_feat, degs, graph_sizes, labels, k, kw):
    logits = dgcnn_classify(params, adj, node_feat, degs, graph_sizes, k, kw)
    b = logits.shape[0]
    loss = -jnp.mean(logits[jnp.arange(b), labels])            # nll_loss on log_softmax
    pred = jnp.argmax(logits, axis=1)
    acc = jnp.mean((pred == labels).astype(jnp.float32))
    return logits, loss, acc


def glorot(key, shape):
    fan_in, fan_out = shape
    limit = (6.0 / (fan_in + fan_out)) ** 0.5
    return jax.random.uniform(key, shape, jnp.float32, -limit, limit)


if __name__ == "__main__":
    key = jax.random.PRNGKey(0)
    keys = jax.random.split(key, 20)

    # small synthetic "cmd_args"
    graph_sizes = [6, 12, 10]          # one graph smaller than k (exercises padding)
    num_node_feats = 8                 # feat_dim + attr_dim ; edge_feat_dim = 0
    latent_dim = [4, 4, 4, 1]
    total_latent = sum(latent_dim)
    k_sort = 10
    c1, c2, kw2 = 16, 32, 5
    hidden, num_class = 16, 3

    N = sum(graph_sizes)
    B = len(graph_sizes)
    pooled_len = int((k_sort - 2) / 2 + 1)
    P = pooled_len - kw2 + 1
    dense_dim = P * c2

    # block-diagonal symmetric 0/1 adjacency (no self loops)
    blocks = []
    for i, sz in enumerate(graph_sizes):
        m = jax.random.uniform(keys[i], (sz, sz))
        a = (m + m.T > 1.0).astype(jnp.float32)
        a = a * (1.0 - jnp.eye(sz, dtype=jnp.float32))
        blocks.append(a)
    adj = jax.scipy.linalg.block_diag(*blocks).astype(jnp.float32)
    degs = jnp.sum(adj, axis=1, keepdims=True) + 1.0           # node_degs = degs + 1

    node_feat = jax.random.normal(keys[4], (N, num_node_feats), jnp.float32)
    labels = jax.random.randint(keys[5], (B,), 0, num_class)

    # parameters (deterministic init; linears glorot + zero bias, conv bias small)
    params = {}
    conv_params = []
    din = num_node_feats
    for lv, dout in enumerate(latent_dim):
        w = glorot(keys[6 + lv], (din, dout))
        b = jnp.zeros((1, dout), jnp.float32)
        conv_params.append((w, b))
        din = dout
    params["conv"] = conv_params

    params["w1c"] = glorot(keys[11], (total_latent, c1))       # conv1d_params1 weight.T
    params["b1c"] = 0.01 * jax.random.normal(keys[12], (1, c1), jnp.float32)
    w2c = glorot(keys[13], (kw2 * c1, c2)).reshape(kw2, c1, c2)  # conv2 taps (KW, C1, C2)
    params["w2c_flat"] = w2c.reshape(kw2 * c1, c2)             # im2col layout [tap-major]
    params["b2c"] = 0.01 * jax.random.normal(keys[14], (1, c2), jnp.float32)

    mlp_w1 = glorot(keys[15], (dense_dim, hidden))             # rows in PyTorch (C2, P) order
    # fold the (B,P,C2)->(B,C2*P) flatten permutation into mlp_w1's rows so the
    # head kernel can flatten channels-last with no transpose:
    params["mlp_w1p"] = (mlp_w1.reshape(c2, P, hidden)
                         .transpose(1, 0, 2)
                         .reshape(P * c2, hidden))
    params["mlp_b1"] = jnp.zeros((1, hidden), jnp.float32)
    params["mlp_w2"] = glorot(keys[16], (hidden, num_class))
    params["mlp_b2"] = jnp.zeros((1, num_class), jnp.float32)

    logits, loss, acc = classifier_forward(
        params, adj, node_feat, degs, graph_sizes, labels, k_sort, kw2)
    jax.block_until_ready((logits, loss, acc))
    assert logits.shape == (B, num_class)
    print("KERNEL_OK")
</pallas_src>

<mosaic_0001>
module attributes {stable_mosaic.version = 11 : i64} {
  func.func @gconv_stack_kernel(%arg0: memref<28x28xbf16, #tpu.memory_space<vmem>>, %arg1: memref<28x8xf32, #tpu.memory_space<vmem>>, %arg2: memref<28x1xf32, #tpu.memory_space<vmem>>, %arg3: memref<8x4xf32, #tpu.memory_space<vmem>>, %arg4: memref<1x4xf32, #tpu.memory_space<vmem>>, %arg5: memref<4x4xf32, #tpu.memory_space<vmem>>, %arg6: memref<1x4xf32, #tpu.memory_space<vmem>>, %arg7: memref<4x4xf32, #tpu.memory_space<vmem>>, %arg8: memref<1x4xf32, #tpu.memory_space<vmem>>, %arg9: memref<4x1xf32, #tpu.memory_space<vmem>>, %arg10: memref<1x1xf32, #tpu.memory_space<vmem>>, %arg11: memref<28x13xf32, #tpu.memory_space<vmem>>) attributes {dimension_semantics = [], scalar_prefetch = 0 : i64, scratch_operands = 0 : i64, tpu.core_type = #tpu.core_type<tc>} {
    %c0 = arith.constant 0 : index
    %c0_0 = arith.constant 0 : index
    %0 = vector.load %arg2[%c0, %c0_0] : memref<28x1xf32, #tpu.memory_space<vmem>>, vector<28x1xf32>
    %1 = tpu.reciprocal %0 {approx = true} : vector<28x1xf32> -> vector<28x1xf32>
    %c0_1 = arith.constant 0 : index
    %c0_2 = arith.constant 0 : index
    %2 = vector.load %arg0[%c0_1, %c0_2] : memref<28x28xbf16, #tpu.memory_space<vmem>>, vector<28x28xbf16>
    %c0_3 = arith.constant 0 : index
    %c0_4 = arith.constant 0 : index
    %3 = vector.load %arg1[%c0_3, %c0_4] : memref<28x8xf32, #tpu.memory_space<vmem>>, vector<28x8xf32>
    %c0_5 = arith.constant 0 : index
    %c0_6 = arith.constant 0 : index
    %4 = vector.load %arg3[%c0_5, %c0_6] : memref<8x4xf32, #tpu.memory_space<vmem>>, vector<8x4xf32>
    %c0_7 = arith.constant 0 : index
    %c0_8 = arith.constant 0 : index
    %5 = vector.load %arg4[%c0_7, %c0_8] : memref<1x4xf32, #tpu.memory_space<vmem>>, vector<1x4xf32>
    %6 = arith.truncf %3 : vector<28x8xf32> to vector<28x8xbf16>
    %cst = arith.constant dense<0.000000e+00> : vector<28x8xf32>
    %7 = tpu.matmul %2, %6, %cst {dimension_numbers = #tpu.dot_dimension_numbers<[1], [0], [0], [1], [0, 0, 1, 1], [], []>} : vector<28x28xbf16>, vector<28x8xbf16>, vector<28x8xf32> -> vector<28x8xf32>
    %8 = arith.addf %7, %3 : vector<28x8xf32>
    %cst_9 = arith.constant dense<0.000000e+00> : vector<28x4xf32>
    %9 = tpu.matmul %8, %4, %cst_9 {dimension_numbers = #tpu.dot_dimension_numbers<[1], [0], [0], [1], [0, 0, 1, 1], [], []>} : vector<28x8xf32>, vector<8x4xf32>, vector<28x4xf32> -> vector<28x4xf32>
    %10 = vector.broadcast %5 : vector<1x4xf32> to vector<28x4xf32>
    %11 = arith.addf %9, %10 : vector<28x4xf32>
    %12 = vector.broadcast %1 : vector<28x1xf32> to vector<28x4xf32>
    %13 = arith.mulf %11, %12 : vector<28x4xf32>
    %14 = math.tanh %13 : vector<28x4xf32>
    %c0_10 = arith.constant 0 : index
    %c0_11 = arith.constant 0 : index
    %15 = vector.load %arg5[%c0_10, %c0_11] : memref<4x4xf32, #tpu.memory_space<vmem>>, vector<4x4xf32>
    %c0_12 = arith.constant 0 : index
    %c0_13 = arith.constant 0 : index
    %16 = vector.load %arg6[%c0_12, %c0_13] : memref<1x4xf32, #tpu.memory_space<vmem>>, vector<1x4xf32>
    %17 = arith.truncf %14 : vector<28x4xf32> to vector<28x4xbf16>
    %cst_14 = arith.constant dense<0.000000e+00> : vector<28x4xf32>
    %18 = tpu.matmul %2, %17, %cst_14 {dimension_numbers = #tpu.dot_dimension_numbers<[1], [0], [0], [1], [0, 0, 1, 1], [], []>} : vector<28x28xbf16>, vector<28x4xbf16>, vector<28x4xf32> -> vector<28x4xf32>
    %19 = arith.addf %18, %14 : vector<28x4xf32>
    %cst_15 = arith.constant dense<0.000000e+00> : vector<28x4xf32>
    %20 = tpu.matmul %19, %15, %cst_15 {dimension_numbers = #tpu.dot_dimension_numbers<[1], [0], [0], [1], [0, 0, 1, 1], [], []>} : vector<28x4xf32>, vector<4x4xf32>, vector<28x4xf32> -> vector<28x4xf32>
    %21 = vector.broadcast %16 : vector<1x4xf32> to vector<28x4xf32>
    %22 = arith.addf %20, %21 : vector<28x4xf32>
    %23 = vector.broadcast %1 : vector<28x1xf32> to vector<28x4xf32>
    %24 = arith.mulf %22, %23 : vector<28x4xf32>
    %25 = math.tanh %24 : vector<28x4xf32>
    %c0_16 = arith.constant 0 : index
    %c0_17 = arith.constant 0 : index
    %26 = vector.load %arg7[%c0_16, %c0_17] : memref<4x4xf32, #tpu.memory_space<vmem>>, vector<4x4xf32>
    %c0_18 = arith.constant 0 : index
    %c0_19 = arith.constant 0 : index
    %27 = vector.load %arg8[%c0_18, %c0_19] : memref<1x4xf32, #tpu.memory_space<vmem>>, vector<1x4xf32>
    %28 = arith.truncf %25 : vector<28x4xf32> to vector<28x4xbf16>
    %cst_20 = arith.constant dense<0.000000e+00> : vector<28x4xf32>
    %29 = tpu.matmul %2, %28, %cst_20 {dimension_numbers = #tpu.dot_dimension_numbers<[1], [0], [0], [1], [0, 0, 1, 1], [], []>} : vector<28x28xbf16>, vector<28x4xbf16>, vector<28x4xf32> -> vector<28x4xf32>
    %30 = arith.addf %29, %25 : vector<28x4xf32>
    %cst_21 = arith.constant dense<0.000000e+00> : vector<28x4xf32>
    %31 = tpu.matmul %30, %26, %cst_21 {dimension_numbers = #tpu.dot_dimension_numbers<[1], [0], [0], [1], [0, 0, 1, 1], [], []>} : vector<28x4xf32>, vector<4x4xf32>, vector<28x4xf32> -> vector<28x4xf32>
    %32 = vector.broadcast %27 : vector<1x4xf32> to vector<28x4xf32>
    %33 = arith.addf %31, %32 : vector<28x4xf32>
    %34 = vector.broadcast %1 : vector<28x1xf32> to vector<28x4xf32>
    %35 = arith.mulf %33, %34 : vector<28x4xf32>
    %36 = math.tanh %35 : vector<28x4xf32>
    %c0_22 = arith.constant 0 : index
    %c0_23 = arith.constant 0 : index
    %37 = vector.load %arg9[%c0_22, %c0_23] : memref<4x1xf32, #tpu.memory_space<vmem>>, vector<4x1xf32>
    %c0_24 = arith.constant 0 : index
    %c0_25 = arith.constant 0 : index
    %38 = vector.load %arg10[%c0_24, %c0_25] : memref<1x1xf32, #tpu.memory_space<vmem>>, vector<1x1xf32>
    %39 = arith.truncf %36 : vector<28x4xf32> to vector<28x4xbf16>
    %cst_26 = arith.constant dense<0.000000e+00> : vector<28x4xf32>
    %40 = tpu.matmul %2, %39, %cst_26 {dimension_numbers = #tpu.dot_dimension_numbers<[1], [0], [0], [1], [0, 0, 1, 1], [], []>} : vector<28x28xbf16>, vector<28x4xbf16>, vector<28x4xf32> -> vector<28x4xf32>
    %41 = arith.addf %40, %36 : vector<28x4xf32>
    %cst_27 = arith.constant dense<0.000000e+00> : vector<28x1xf32>
    %42 = tpu.matmul %41, %37, %cst_27 {dimension_numbers = #tpu.dot_dimension_numbers<[1], [0], [0], [1], [0, 0, 1, 1], [], []>} : vector<28x4xf32>, vector<4x1xf32>, vector<28x1xf32> -> vector<28x1xf32>
    %43 = vector.broadcast %38 : vector<1x1xf32> to vector<28x1xf32>
    %44 = arith.addf %42, %43 : vector<28x1xf32>
    %45 = arith.mulf %44, %1 : vector<28x1xf32>
    %46 = math.tanh %45 : vector<28x1xf32>
    %47 = tpu.concatenate %14, %25, %36, %46 in 1 : vector<28x4xf32>, vector<28x4xf32>, vector<28x4xf32>, vector<28x1xf32> -> vector<28x13xf32>
    %c0_28 = arith.constant 0 : index
    %c0_29 = arith.constant 0 : index
    %48 = vector.load %arg11[%c0_28, %c0_29] : memref<28x13xf32, #tpu.memory_space<vmem>>, vector<28x13xf32>
    tpu.vector_store %arg11[%c0_28, %c0_29], %47 {strides = array<i32>} : memref<28x13xf32, #tpu.memory_space<vmem>>, vector<28x13xf32>,
    return
  }
}

</mosaic_0001>

<llo_original>
// kernel: tpu_custom_call.1
$region0: #{tpu_custom_call.1}
  #allocation0 [shape = 'u32[]', space=smem, size = 0x4, offset = 0x4, fixed_abs, tag = 'smem constant byte address 0x4 - core index']
  #allocation1 [shape = 'u32[72,128]{1,0:T(1,128)}', space=vmem, size = 0x9000, scoped, tag = 'internal scratch']
  #allocation2 [shape = 'f32[1,1]{1,0:T(1,128)S(1)}', space=vmem, size = 0x200, scoped, tag = 'scoped memory for tpu_custom_call.1']
  %s0 = inlined_call_operand.vmem [shape: bf16[28,28], index: 0, kind: input, shape index: {}]
  %s1 = inlined_call_operand.vmem [shape: f32[28,8], index: 1, kind: input, shape index: {}]
  %s2 = inlined_call_operand.vmem [shape: f32[28,1], index: 2, kind: input, shape index: {}]
  %s3 = inlined_call_operand.vmem [shape: f32[8,4], index: 3, kind: input, shape index: {}]
  %s4 = inlined_call_operand.vmem [shape: f32[1,4], index: 4, kind: input, shape index: {}]
  %s5 = inlined_call_operand.vmem [shape: f32[4,4], index: 5, kind: input, shape index: {}]
  %s6 = inlined_call_operand.vmem [shape: f32[1,4], index: 6, kind: input, shape index: {}]
  %s7 = inlined_call_operand.vmem [shape: f32[4,4], index: 7, kind: input, shape index: {}]
  %s8 = inlined_call_operand.vmem [shape: f32[1,4], index: 8, kind: input, shape index: {}]
  %s9 = inlined_call_operand.vmem [shape: f32[4,1], index: 9, kind: input, shape index: {}]
  %s10 = inlined_call_operand.<no memory space> [shape: f32[1,1], index: 10, kind: input, shape index: {}]
  %s11 = inlined_call_operand.vmem [shape: f32[28,13], index: 11, kind: output, shape index: {}]
  %s12 = sld [smem:[#allocation0]]
  $region54: #{tpu_custom_call.1} parent=0
    _
  %s14 = ssub.s32 1, %s12
  %s15 = scalar_select 0, %s14, %s12
  %v16 = vstv %s10
  %17 = vst [vmem:[#allocation2] sm:$0x1] %v16
  // Predicated region
  $region2: #{tpu_custom_call.1} parent=0 // pred_check
    _
  $region3: #{tpu_custom_call.1} parent=0 // pred_check_branch
    %19 = sbr.rel (0) target = $region5
  $region4: #{tpu_custom_call.1} parent=0 // pred_region
    _
  $region5: #{tpu_custom_call.1} parent=0 // pred_fallthru
    _
  // Predicated region
  $region6: #{tpu_custom_call.1} parent=0 // pred_check
    _
  $region7: #{tpu_custom_call.1} parent=0 // pred_check_branch
    %21 = sbr.rel (0) target = $region9
  $region8: #{tpu_custom_call.1} parent=0 // pred_region
    _
  $region9: #{tpu_custom_call.1} parent=0 // pred_fallthru
    _
  // Predicated region
  $region10: #{tpu_custom_call.1} parent=0 // pred_check
    _
  $region11: #{tpu_custom_call.1} parent=0 // pred_check_branch
    %23 = sbr.rel (0) target = $region13
  $region12: #{tpu_custom_call.1} parent=0 // pred_region
    _
  $region13: #{tpu_custom_call.1} parent=0 // pred_fallthru
    _
  // Predicated region
  $region14: #{tpu_custom_call.1} parent=0 // pred_check
    _
  $region15: #{tpu_custom_call.1} parent=0 // pred_check_branch
    %25 = sbr.rel (0) target = $region17
  $region16: #{tpu_custom_call.1} parent=0 // pred_region
    _
  $region17: #{tpu_custom_call.1} parent=0 // pred_fallthru
    _
  // Predicated region
  $region18: #{tpu_custom_call.1} parent=0 // pred_check
    _
  $region19: #{tpu_custom_call.1} parent=0 // pred_check_branch
    %27 = sbr.rel (0) target = $region21
  $region20: #{tpu_custom_call.1} parent=0 // pred_region
    _
  $region21: #{tpu_custom_call.1} parent=0 // pred_fallthru
    _
  // Predicated region
  $region22: #{tpu_custom_call.1} parent=0 // pred_check
    _
  $region23: #{tpu_custom_call.1} parent=0 // pred_check_branch
    %29 = sbr.rel (0) target = $region25
  $region24: #{tpu_custom_call.1} parent=0 // pred_region
    _
  $region25: #{tpu_custom_call.1} parent=0 // pred_fallthru
    _
  // Predicated region
  $region26: #{tpu_custom_call.1} parent=0 // pred_check
    _
  $region27: #{tpu_custom_call.1} parent=0 // pred_check_branch
    %31 = sbr.rel (0) target = $region29
  $region28: #{tpu_custom_call.1} parent=0 // pred_region
    _
  $region29: #{tpu_custom_call.1} parent=0 // pred_fallthru
    _
  // Predicated region
  $region30: #{tpu_custom_call.1} parent=0 // pred_check
    _
  $region31: #{tpu_custom_call.1} parent=0 // pred_check_branch
    %33 = sbr.rel (0) target = $region33
  $region32: #{tpu_custom_call.1} parent=0 // pred_region
    _
  $region33: #{tpu_custom_call.1} parent=0 // pred_fallthru
    _
  // Predicated region
  $region34: #{tpu_custom_call.1} parent=0 // pred_check
    _
  $region35: #{tpu_custom_call.1} parent=0 // pred_check_branch
    %35 = sbr.rel (0) target = $region37
  $region36: #{tpu_custom_call.1} parent=0 // pred_region
    _
  $region37: #{tpu_custom_call.1} parent=0 // pred_fallthru
    _
  // Predicated region
  $region38: #{tpu_custom_call.1} parent=0 // pred_check
    _
  $region39: #{tpu_custom_call.1} parent=0 // pred_check_branch
    %37 = sbr.rel (0) target = $region41
  $region40: #{tpu_custom_call.1} parent=0 // pred_region
    _
  $region41: #{tpu_custom_call.1} parent=0 // pred_fallthru
    _
  // Predicated region
  $region42: #{tpu_custom_call.1} parent=0 // pred_check
    _
  $region43: #{tpu_custom_call.1} parent=0 // pred_check_branch
    %39 = sbr.rel (0) target = $region45
  $region44: #{tpu_custom_call.1} parent=0 // pred_region
    _
  $region45: #{tpu_custom_call.1} parent=0 // pred_fallthru
    _
  %v41 = vld [vmem:[%s2] sm:$0xff]
  %v42 = vld [vmem:[%s2 + $0x8] sm:$0xff]
  %v43 = vld [vmem:[%s2 + $0x10] sm:$0xff]
  %v44 = vld [vmem:[%s2 + $0x18] sm:$0xf]
  %v45 = vrcp.pop %v41
  %v46 = vrcp.pop %v42
  %v47 = vrcp.pop %v43
  %v48 = vrcp.pop %v44
  %v49 = vld [vmem:[%s0] sm:$0xf]
  %v50 = vld [vmem:[%s0 + $0x4] sm:$0xf]
  %v51 = vld [vmem:[%s0 + $0x8] sm:$0xf]
  %v52 = vld [vmem:[%s0 + $0xc] sm:$0x3]
  %v53 = vld [vmem:[%s1] sm:$0xff]
  %v54 = vld [vmem:[%s1 + $0x8] sm:$0xff]
  %v55 = vld [vmem:[%s1 + $0x10] sm:$0xff]
  %v56 = vld [vmem:[%s1 + $0x18] sm:$0xf]
  %v57 = vld [vmem:[%s3] sm:$0xff]
  %v58 = vld [vmem:[%s4] sm:$0x1]
  %v59 = vpack.c.bf16 %v54, %v53
  %v60 = vpack.c.bf16 %v56, %v55
  %v65 = vunpack.c.l.b16 %v49
  %v66 = vunpack.c.l.b16 %v50
  %v67 = vunpack.c.l.b16 %v51
  %v68 = vunpack.c.l.b16 %v52
  %v69 = vpack.c.b16 %v66, %v65
  %v70 = vpack.c.b16 %v68, %v67
  %vm71 = vcmask 228352
  %v73 = vsel %vm71, %v69, 0
  %v76 = vsel %vm71, %v70, 0
  %vm78 = vcmask 1045504
  %v80 = vsel %vm78, %v60, 0
  %82 = vmatpush.bf16.msra.mxu0 0
  %83 = vmatpush.bf16.msra.mxu0 0
  %84 = vmatpush.bf16.msra.mxu0 0
  %85 = vmatpush.bf16.msra.mxu0 0
  %86 = vmatpush.bf16.msra.mxu0 0
  %87 = vmatpush.bf16.msra.mxu0 0
  %88 = vmatpush.bf16.msra.mxu0 %v80
  %89 = vmatpush.bf16.msra.mxu0 %v59
  %90 = vmatmul.bf16.gmra.mxu0 %v73
  %v91 = vpop.f32.mrf.mxu0
  %v92 = vadd.f32 %v53, %v91
  %v93 = vpop.f32.mrf.mxu0
  %v94 = vadd.f32 %v54, %v93
  %95 = vmatmul.bf16.gmra.mxu0 %v76
  %v96 = vpop.f32.mrf.mxu0
  %v97 = vadd.f32 %v55, %v96
  %v98 = vpop.f32.mrf.mxu0
  %v99 = vadd.f32 %v56, %v98
  %100 = vdwg.mxu0
  %v102 = vperm.slane %v58, 0
  %vm104 = vcmask 64512
  %v106 = vsel %vm104, %v92, 0
  %v109 = vsel %vm104, %v94, 0
  %v112 = vsel %vm104, %v97, 0
  %v115 = vsel %vm104, %v99, 0
  %117 = vmatpush.msra.mxu0 0.0
  %118 = vmatpush.msra.mxu0 0.0
  %119 = vmatpush.msra.mxu0 0.0
  %120 = vmatpush.msra.mxu0 0.0
  %121 = vmatpush.msra.mxu0 0.0
  %122 = vmatpush.msra.mxu0 0.0
  %123 = vmatpush.msra.mxu0 0.0
  %124 = vmatpush.msra.mxu0 0.0
  %125 = vmatpush.msra.mxu0 0.0
  %126 = vmatpush.msra.mxu0 0.0
  %127 = vmatpush.msra.mxu0 0.0
  %128 = vmatpush.msra.mxu0 0.0
  %129 = vmatpush.msra.mxu0 0.0
  %130 = vmatpush.msra.mxu0 0.0
  %131 = vmatpush.msra.mxu0 0.0
  %132 = vmatpush.msra.mxu0 %v57
  %133 = vmatmul.f32.gmra.mxu0 %v106
  %v134 = vpop.f32.mrf.mxu0
  %v135 = vadd.f32 %v102, %v134
  %136 = vmatmul.f32.gmra.mxu0 %v109
  %v137 = vpop.f32.mrf.mxu0
  %v138 = vadd.f32 %v102, %v137
  %139 = vmatmul.f32.gmra.mxu0 %v112
  %v140 = vpop.f32.mrf.mxu0
  %v141 = vadd.f32 %v102, %v140
  %142 = vmatmul.f32.gmra.mxu0 %v115
  %v143 = vpop.f32.mrf.mxu0
  %v144 = vadd.f32 %v102, %v143
  %145 = vdwg.mxu0
  %147 = vset.pattern.permute.xlu0 0
  %148 = vperm.xlu0 %147, %v45
  %v149 = vpop.permute.xlu0 %148
  %152 = vset.pattern.permute.xlu0 0
  %153 = vperm.xlu0 %152, %v46
  %v154 = vpop.permute.xlu0 %153
  %157 = vset.pattern.permute.xlu0 0
  %158 = vperm.xlu0 %157, %v47
  %v159 = vpop.permute.xlu0 %158
  %162 = vset.pattern.permute.xlu0 0
  %163 = vperm.xlu0 %162, %v48
  %v164 = vpop.permute.xlu0 %163
  %v166 = vmul.f32 %v135, %v149
  %v167 = vmul.f32 %v138, %v154
  %v168 = vmul.f32 %v141, %v159
  %v169 = vmul.f32 %v144, %v164
  %v170 = vtanh.pop %v166
  %v171 = vtanh.pop %v167
  %v172 = vtanh.pop %v168
  %v173 = vtanh.pop %v169
  %v174 = vld [vmem:[%s5] sm:$0xf]
  %v175 = vld [vmem:[%s6] sm:$0x1]
  %v176 = vpack.c.bf16 %v171, %v170
  %v177 = vpack.c.bf16 %v173, %v172
  %v179 = vsel %vm78, %v177, 0
  %181 = vmatpush.bf16.msra.mxu0 0
  %182 = vmatpush.bf16.msra.mxu0 0
  %183 = vmatpush.bf16.msra.mxu0 0
  %184 = vmatpush.bf16.msra.mxu0 0
  %185 = vmatpush.bf16.msra.mxu0 0
  %186 = vmatpush.bf16.msra.mxu0 0
  %187 = vmatpush.bf16.msra.mxu0 %v179
  %188 = vmatpush.bf16.msra.mxu0 %v176
  %189 = vmatmul.bf16.gmra.mxu0 %v73
  %v190 = vpop.f32.mrf.mxu0
  %v191 = vadd.f32 %v170, %v190
  %v192 = vpop.f32.mrf.mxu0
  %v193 = vadd.f32 %v171, %v192
  %194 = vmatmul.bf16.gmra.mxu0 %v76
  %v195 = vpop.f32.mrf.mxu0
  %v196 = vadd.f32 %v172, %v195
  %v197 = vpop.f32.mrf.mxu0
  %v198 = vadd.f32 %v173, %v197
  %199 = vdwg.mxu0
  %v201 = vperm.slane %v175, 0
  %vm203 = vcmask 31744
  %v205 = vsel %vm203, %v191, 0
  %v208 = vsel %vm203, %v193, 0
  %v211 = vsel %vm203, %v196, 0
  %v214 = vsel %vm203, %v198, 0
  %vm216 = vcmask 1043456
  %v218 = vsel %vm216, %v174, 0
  %220 = vmatpush.msra.mxu0 0.0
  %221 = vmatpush.msra.mxu0 0.0
  %222 = vmatpush.msra.mxu0 0.0
  %223 = vmatpush.msra.mxu0 0.0
  %224 = vmatpush.msra.mxu0 0.0
  %225 = vmatpush.msra.mxu0 0.0
  %226 = vmatpush.msra.mxu0 0.0
  %227 = vmatpush.msra.mxu0 0.0
  %228 = vmatpush.msra.mxu0 0.0
  %229 = vmatpush.msra.mxu0 0.0
  %230 = vmatpush.msra.mxu0 0.0
  %231 = vmatpush.msra.mxu0 0.0
  %232 = vmatpush.msra.mxu0 0.0
  %233 = vmatpush.msra.mxu0 0.0
  %234 = vmatpush.msra.mxu0 0.0
  %235 = vmatpush.msra.mxu0 %v218
  %236 = vmatmul.f32.gmra.mxu0 %v205
  %v237 = vpop.f32.mrf.mxu0
  %v238 = vadd.f32 %v201, %v237
  %239 = vmatmul.f32.gmra.mxu0 %v208
  %v240 = vpop.f32.mrf.mxu0
  %v241 = vadd.f32 %v201, %v240
  %242 = vmatmul.f32.gmra.mxu0 %v211
  %v243 = vpop.f32.mrf.mxu0
  %v244 = vadd.f32 %v201, %v243
  %245 = vmatmul.f32.gmra.mxu0 %v214
  %v246 = vpop.f32.mrf.mxu0
  %v247 = vadd.f32 %v201, %v246
  %248 = vdwg.mxu0
  %v249 = vmul.f32 %v238, %v149
  %v250 = vmul.f32 %v241, %v154
  %v251 = vmul.f32 %v244, %v159
  %v252 = vmul.f32 %v247, %v164
  %v253 = vtanh.pop %v249
  %v254 = vtanh.pop %v250
  %v255 = vtanh.pop %v251
  %v256 = vtanh.pop %v252
  %v257 = vld [vmem:[%s7] sm:$0xf]
  %v258 = vld [vmem:[%s8] sm:$0x1]
  %v259 = vpack.c.bf16 %v254, %v253
  %v260 = vpack.c.bf16 %v256, %v255
  %v262 = vsel %vm78, %v260, 0
  %264 = vmatpush.bf16.msra.mxu0 0
  %265 = vmatpush.bf16.msra.mxu0 0
  %266 = vmatpush.bf16.msra.mxu0 0
  %267 = vmatpush.bf16.msra.mxu0 0
  %268 = vmatpush.bf16.msra.mxu0 0
  %269 = vmatpush.bf16.msra.mxu0 0
  %270 = vmatpush.bf16.msra.mxu0 %v262
  %271 = vmatpush.bf16.msra.mxu0 %v259
  %272 = vmatmul.bf16.gmra.mxu0 %v73
  %v273 = vpop.f32.mrf.mxu0
  %v274 = vadd.f32 %v253, %v273
  %v275 = vpop.f32.mrf.mxu0
  %v276 = vadd.f32 %v254, %v275
  %277 = vmatmul.bf16.gmra.mxu0 %v76
  %v278 = vpop.f32.mrf.mxu0
  %v279 = vadd.f32 %v255, %v278
  %v280 = vpop.f32.mrf.mxu0
  %v281 = vadd.f32 %v256, %v280
  %282 = vdwg.mxu0
  %v284 = vperm.slane %v258, 0
  %v287 = vsel %vm203, %v274, 0
  %v290 = vsel %vm203, %v276, 0
  %v293 = vsel %vm203, %v279, 0
  %v296 = vsel %vm203, %v281, 0
  %v299 = vsel %vm216, %v257, 0
  %301 = vmatpush.msra.mxu0 0.0
  %302 = vmatpush.msra.mxu0 0.0
  %303 = vmatpush.msra.mxu0 0.0
  %304 = vmatpush.msra.mxu0 0.0
  %305 = vmatpush.msra.mxu0 0.0
  %306 = vmatpush.msra.mxu0 0.0
  %307 = vmatpush.msra.mxu0 0.0
  %308 = vmatpush.msra.mxu0 0.0
  %309 = vmatpush.msra.mxu0 0.0
  %310 = vmatpush.msra.mxu0 0.0
  %311 = vmatpush.msra.mxu0 0.0
  %312 = vmatpush.msra.mxu0 0.0
  %313 = vmatpush.msra.mxu0 0.0
  %314 = vmatpush.msra.mxu0 0.0
  %315 = vmatpush.msra.mxu0 0.0
  %316 = vmatpush.msra.mxu0 %v299
  %317 = vmatmul.f32.gmra.mxu0 %v287
  %v318 = vpop.f32.mrf.mxu0
  %v319 = vadd.f32 %v284, %v318
  %320 = vmatmul.f32.gmra.mxu0 %v290
  %v321 = vpop.f32.mrf.mxu0
  %v322 = vadd.f32 %v284, %v321
  %323 = vmatmul.f32.gmra.mxu0 %v293
  %v324 = vpop.f32.mrf.mxu0
  %v325 = vadd.f32 %v284, %v324
  %326 = vmatmul.f32.gmra.mxu0 %v296
  %v327 = vpop.f32.mrf.mxu0
  %v328 = vadd.f32 %v284, %v327
  %329 = vdwg.mxu0
  %v330 = vmul.f32 %v319, %v149
  %v331 = vmul.f32 %v322, %v154
  %v332 = vmul.f32 %v325, %v159
  %v333 = vmul.f32 %v328, %v164
  %v334 = vtanh.pop %v330
  %v335 = vtanh.pop %v331
  %v336 = vtanh.pop %v332
  %v337 = vtanh.pop %v333
  %v338 = vld [vmem:[%s9] sm:$0xf]
  %v339 = vld [vmem:[#allocation2] sm:$0x1]
  %v340 = vpack.c.bf16 %v335, %v334
  %v341 = vpack.c.bf16 %v337, %v336
  %v343 = vsel %vm78, %v341, 0
  %345 = vmatpush.bf16.msra.mxu0 0
  %346 = vmatpush.bf16.msra.mxu0 0
  %347 = vmatpush.bf16.msra.mxu0 0
  %348 = vmatpush.bf16.msra.mxu0 0
  %349 = vmatpush.bf16.msra.mxu0 0
  %350 = vmatpush.bf16.msra.mxu0 0
  %351 = vmatpush.bf16.msra.mxu0 %v343
  %352 = vmatpush.bf16.msra.mxu0 %v340
  %353 = vmatmul.bf16.gmra.mxu0 %v73
  %v354 = vpop.f32.mrf.mxu0
  %v355 = vadd.f32 %v334, %v354
  %v356 = vpop.f32.mrf.mxu0
  %v357 = vadd.f32 %v335, %v356
  %358 = vmatmul.bf16.gmra.mxu0 %v76
  %v359 = vpop.f32.mrf.mxu0
  %v360 = vadd.f32 %v336, %v359
  %v361 = vpop.f32.mrf.mxu0
  %v362 = vadd.f32 %v337, %v361
  %363 = vdwg.mxu0
  %v365 = vperm.slane %v339, 0
  %v368 = vsel %vm203, %v355, 0
  %v371 = vsel %vm203, %v357, 0
  %v374 = vsel %vm203, %v360, 0
  %v377 = vsel %vm203, %v362, 0
  %v380 = vsel %vm216, %v338, 0
  %382 = vmatpush.msra.mxu0 0.0
  %383 = vmatpush.msra.mxu0 0.0
  %384 = vmatpush.msra.mxu0 0.0
  %385 = vmatpush.msra.mxu0 0.0
  %386 = vmatpush.msra.mxu0 0.0
  %387 = vmatpush.msra.mxu0 0.0
  %388 = vmatpush.msra.mxu0 0.0
  %389 = vmatpush.msra.mxu0 0.0
  %390 = vmatpush.msra.mxu0 0.0
  %391 = vmatpush.msra.mxu0 0.0
  %392 = vmatpush.msra.mxu0 0.0
  %393 = vmatpush.msra.mxu0 0.0
  %394 = vmatpush.msra.mxu0 0.0
  %395 = vmatpush.msra.mxu0 0.0
  %396 = vmatpush.msra.mxu0 0.0
  %397 = vmatpush.msra.mxu0 %v380
  %398 = vmatmul.f32.gmra.mxu0 %v368
  %v399 = vpop.f32.mrf.mxu0
  %v400 = vadd.f32 %v365, %v399
  %401 = vmatmul.f32.gmra.mxu0 %v371
  %v402 = vpop.f32.mrf.mxu0
  %v403 = vadd.f32 %v365, %v402
  %404 = vmatmul.f32.gmra.mxu0 %v374
  %v405 = vpop.f32.mrf.mxu0
  %v406 = vadd.f32 %v365, %v405
  %407 = vmatmul.f32.gmra.mxu0 %v377
  %v408 = vpop.f32.mrf.mxu0
  %v409 = vadd.f32 %v365, %v408
  %410 = vdwg.mxu0
  %v411 = vmul.f32 %v400, %v45
  %v412 = vmul.f32 %v403, %v46
  %v413 = vmul.f32 %v406, %v47
  %v414 = vmul.f32 %v409, %v48
  %v415 = vtanh.pop %v411
  %v416 = vtanh.pop %v412
  %v417 = vtanh.pop %v413
  %v418 = vtanh.pop %v414
  %423 = vrot.lane.b32.xlu0 %v253, 4
  %v424 = vpop.permute.xlu0 %423
  %425 = vrot.lane.b32.xlu0 %v254, 4
  %v426 = vpop.permute.xlu0 %425
  %427 = vrot.lane.b32.xlu0 %v255, 4
  %v428 = vpop.permute.xlu0 %427
  %429 = vrot.lane.b32.xlu0 %v256, 4
  %v430 = vpop.permute.xlu0 %429
  %439 = vrot.lane.b32.xlu0 %v334, 8
  %v440 = vpop.permute.xlu0 %439
  %441 = vrot.lane.b32.xlu0 %v335, 8
  %v442 = vpop.permute.xlu0 %441
  %443 = vrot.lane.b32.xlu0 %v336, 8
  %v444 = vpop.permute.xlu0 %443
  %445 = vrot.lane.b32.xlu0 %v337, 8
  %v446 = vpop.permute.xlu0 %445
  %455 = vrot.lane.b32.xlu0 %v415, 12
  %v456 = vpop.permute.xlu0 %455
  %457 = vrot.lane.b32.xlu0 %v416, 12
  %v458 = vpop.permute.xlu0 %457
  %459 = vrot.lane.b32.xlu0 %v417, 12
  %v460 = vpop.permute.xlu0 %459
  %461 = vrot.lane.b32.xlu0 %v418, 12
  %v462 = vpop.permute.xlu0 %461
  %v467 = vsel %vm203, %v170, %v424
  %v468 = vsel %vm203, %v171, %v426
  %v469 = vsel %vm203, %v172, %v428
  %v470 = vsel %vm203, %v173, %v430
  %v471 = vsel %vm104, %v467, %v440
  %v472 = vsel %vm104, %v468, %v442
  %v473 = vsel %vm104, %v469, %v444
  %v474 = vsel %vm104, %v470, %v446
  %vm475 = vcmask 97280
  %v476 = vsel %vm475, %v471, %v456
  %v477 = vsel %vm475, %v472, %v458
  %v478 = vsel %vm475, %v473, %v460
  %v479 = vsel %vm475, %v474, %v462
  %vm480 = vcmask 105472
  %481 = vst.msk [vmem:[%s11] sm:$0xff] %vm480, %v476
  %482 = vst.msk [vmem:[%s11 + $0x8] sm:$0xff] %vm480, %v477
  %483 = vst.msk [vmem:[%s11 + $0x10] sm:$0xff] %vm480, %v478
  %vm484 = vcmask 101376
  %485 = vst.msk [vmem:[%s11 + $0x18] sm:$0xf] %vm484, %v479
  // Predicated region
  $region46: #{tpu_custom_call.1} parent=0 // pred_check
    _
  $region47: #{tpu_custom_call.1} parent=0 // pred_check_branch
    %487 = sbr.rel (0) target = $region49
  $region48: #{tpu_custom_call.1} parent=0 // pred_region
    _
  $region49: #{tpu_custom_call.1} parent=0 // pred_fallthru
    _
  // Predicated region
  $region50: #{tpu_custom_call.1} parent=0 // pred_check
    _
  $region51: #{tpu_custom_call.1} parent=0 // pred_check_branch
    %489 = sbr.rel (0) target = $region53
  $region52: #{tpu_custom_call.1} parent=0 // pred_region
    _
  $region53: #{tpu_custom_call.1} parent=0 // pred_fallthru
    _

</llo_original>
